<compile_context>
chip_gen: v7x
topology: tpu7x:2x2x1
jax: 0.10.0
libtpu: 0.0.40
codegen_flags: <defaults>
</compile_context>

<pallas_src>
import functools
import math

import jax
import jax.numpy as jnp
from jax.experimental import pallas as pl
from jax.experimental.pallas import tpu as pltpu


# ----------------------------------------------------------------------------
# helpers
# ----------------------------------------------------------------------------
def _pick_block_rows(rows, target=512):
    """Largest row-tile <= target that evenly divides `rows` (mult. of 8)."""
    if rows <= target:
        return rows
    for cand in range(min(target, rows), 7, -8):
        if rows % cand == 0:
            return cand
    return rows  # fall back to a single block


def make_dropout_scales(key, p, B, S, D, H, d_ff):
    """Pre-computed dropout scale arrays: 0 with prob p, else 1/(1-p)."""
    rows = B * S
    shapes = {
        "attn": (B, H, S, S),
        "resid1": (rows, D),
        "ffn": (rows, d_ff),
        "resid2": (rows, D),
    }
    out = {}
    ks = jax.random.split(key, len(shapes))
    for k, (name, shp) in zip(ks, shapes.items()):
        if p <= 0.0:
            out[name] = jnp.ones(shp, jnp.float32)
        else:
            keep = jax.random.bernoulli(k, 1.0 - p, shp)
            out[name] = keep.astype(jnp.float32) * (1.0 / (1.0 - p))
    return out


# ----------------------------------------------------------------------------
# Kernel 1: fused LayerNormalizaion + Linear (+ optional ReLU + dropout scale)
#   out = [drop *] [relu] ( LN(x) @ W + b )
# ----------------------------------------------------------------------------
def _ln_matmul_kernel(alpha_ref, beta_ref, x_ref, w_ref, b_ref, *rest,
                      eps, relu, has_drop):
    if has_drop:
        drop_ref, o_ref = rest
    else:
        (o_ref,) = rest

    x = x_ref[...].astype(jnp.float32)
    d = x.shape[-1]
    # single-pass statistics (one pair of cross-lane reductions)
    s1 = jnp.sum(x, axis=-1, keepdims=True)
    s2 = jnp.sum(x * x, axis=-1, keepdims=True)
    mean = s1 * (1.0 / d)
    var = (s2 - s1 * mean) * (1.0 / (d - 1))       # unbiased (ddof=1)
    std = jnp.sqrt(jnp.maximum(var, 0.0))
    inv = 1.0 / (std + eps)                        # eps added to std (module semantics)
    normed = (alpha_ref[0] * inv) * (x - mean) + beta_ref[0]

    y = jnp.dot(normed, w_ref[...].astype(jnp.float32),
                preferred_element_type=jnp.float32)
    y = y + b_ref[...]                             # (1, N) broadcast
    if relu:
        y = jnp.maximum(y, 0.0)
    if has_drop:
        y = y * drop_ref[...]
    o_ref[...] = y.astype(o_ref.dtype)


def ln_matmul(x2d, w, b, alpha, beta, *, eps=1e-6, relu=False, drop_scale=None,
              block_rows=None):
    rows, d_in = x2d.shape
    d_out = w.shape[1]
    br = _pick_block_rows(rows) if block_rows is None else block_rows
    assert rows % br == 0
    grid = (rows // br,)

    in_specs = [
        pl.BlockSpec(memory_space=pltpu.MemorySpace.SMEM),     # alpha (1,)
        pl.BlockSpec(memory_space=pltpu.MemorySpace.SMEM),     # beta  (1,)
        pl.BlockSpec((br, d_in), lambda i: (i, 0)),            # x rows
        pl.BlockSpec((d_in, d_out), lambda i: (0, 0)),          # W resident
        pl.BlockSpec((1, d_out), lambda i: (0, 0)),             # bias resident
    ]
    args = [alpha, beta, x2d, w, b.reshape(1, d_out)]
    has_drop = drop_scale is not None
    if has_drop:
        in_specs.append(pl.BlockSpec((br, d_out), lambda i: (i, 0)))
        args.append(drop_scale)

    return pl.pallas_call(
        functools.partial(_ln_matmul_kernel, eps=eps, relu=relu,
                          has_drop=has_drop),
        out_shape=jax.ShapeDtypeStruct((rows, d_out), x2d.dtype),
        grid=grid,
        in_specs=in_specs,
        out_specs=pl.BlockSpec((br, d_out), lambda i: (i, 0)),
        compiler_params=pltpu.CompilerParams(dimension_semantics=("parallel",)),
    )(*args)


# ----------------------------------------------------------------------------
# Kernel 2: attention core (per batch element, all heads in-block)
#   out = softmax(q k^T / sqrt(dk) masked) * attn_drop @ v
# ----------------------------------------------------------------------------
def _attention_kernel(q_ref, k_ref, v_ref, m_ref, drop_ref, o_ref, *, scale):
    q = q_ref[0].astype(jnp.float32)        # (H, S, Dk)
    k = k_ref[0].astype(jnp.float32)
    v = v_ref[0].astype(jnp.float32)
    scores = jnp.einsum("hqd,hkd->hqk", q, k,
                        preferred_element_type=jnp.float32) * scale
    m = m_ref[0]                            # (1, S, S) -> broadcasts over heads
    scores = jnp.where(m == 0.0, -1000000000.0, scores)
    attn = jax.nn.softmax(scores, axis=-1)
    attn = attn * drop_ref[0]               # dropout on attention probabilities
    out = jnp.einsum("hqk,hkd->hqd", attn, v,
                     preferred_element_type=jnp.float32)
    o_ref[0] = out.astype(o_ref.dtype)


def attention(q, k, v, mask, attn_drop, *, scale):
    B, H, S, Dk = q.shape
    return pl.pallas_call(
        functools.partial(_attention_kernel, scale=scale),
        out_shape=jax.ShapeDtypeStruct((B, H, S, Dk), q.dtype),
        grid=(B,),
        in_specs=[
            pl.BlockSpec((1, H, S, Dk), lambda b: (b, 0, 0, 0)),
            pl.BlockSpec((1, H, S, Dk), lambda b: (b, 0, 0, 0)),
            pl.BlockSpec((1, H, S, Dk), lambda b: (b, 0, 0, 0)),
            pl.BlockSpec((1, 1, S, S), lambda b: (b, 0, 0, 0)),
            pl.BlockSpec((1, H, S, S), lambda b: (b, 0, 0, 0)),
        ],
        out_specs=pl.BlockSpec((1, H, S, Dk), lambda b: (b, 0, 0, 0)),
        compiler_params=pltpu.CompilerParams(dimension_semantics=("parallel",)),
    )(q, k, v, mask, attn_drop)


# ----------------------------------------------------------------------------
# Kernel 3: fused Linear + dropout scale + residual add
#   out = x_resid + drop * (a @ W + b)
# ----------------------------------------------------------------------------
def _matmul_resid_kernel(a_ref, w_ref, b_ref, x_ref, drop_ref, o_ref):
    y = jnp.dot(a_ref[...].astype(jnp.float32), w_ref[...].astype(jnp.float32),
                preferred_element_type=jnp.float32)
    y = y + b_ref[...]
    o_ref[...] = (x_ref[...].astype(jnp.float32)
                  + drop_ref[...] * y).astype(o_ref.dtype)


def matmul_dropout_residual(a2d, w, b, x2d, drop_scale, *, block_rows=None):
    rows, d_in = a2d.shape
    d_out = w.shape[1]
    br = _pick_block_rows(rows) if block_rows is None else block_rows
    assert rows % br == 0
    grid = (rows // br,)
    return pl.pallas_call(
        _matmul_resid_kernel,
        out_shape=jax.ShapeDtypeStruct((rows, d_out), x2d.dtype),
        grid=grid,
        in_specs=[
            pl.BlockSpec((br, d_in), lambda i: (i, 0)),
            pl.BlockSpec((d_in, d_out), lambda i: (0, 0)),   # W resident
            pl.BlockSpec((1, d_out), lambda i: (0, 0)),
            pl.BlockSpec((br, d_out), lambda i: (i, 0)),     # residual x
            pl.BlockSpec((br, d_out), lambda i: (i, 0)),     # dropout scale
        ],
        out_specs=pl.BlockSpec((br, d_out), lambda i: (i, 0)),
        compiler_params=pltpu.CompilerParams(dimension_semantics=("parallel",)),
    )(a2d, w, b.reshape(1, d_out), x2d, drop_scale)


# ----------------------------------------------------------------------------
# EncoderBlock forward (Pallas kernels + thin reshape/transpose glue)
# ----------------------------------------------------------------------------
def encoder_block(x, src_mask, params, drops, *, h, eps=1e-6):
    B, S, D = x.shape
    assert D % h == 0
    d_k = D // h
    rows = B * S
    x2d = x.reshape(rows, D)

    # ---- residual connection 0: self-attention sublayer ----
    qkv = ln_matmul(x2d, params["w_qkv"], params["b_qkv"],
                    params["alpha1"], params["beta1"], eps=eps)       # (rows, 3D)
    qkv = qkv.reshape(B, S, 3, h, d_k)
    q = qkv[:, :, 0].transpose(0, 2, 1, 3)                            # (B, h, S, d_k)
    k = qkv[:, :, 1].transpose(0, 2, 1, 3)
    v = qkv[:, :, 2].transpose(0, 2, 1, 3)
    a = attention(q, k, v, src_mask, drops["attn"], scale=1.0 / math.sqrt(d_k))
    a2d = a.transpose(0, 2, 1, 3).reshape(rows, D)
    x2d = matmul_dropout_residual(a2d, params["w_o"], params["b_o"],
                                  x2d, drops["resid1"])

    # ---- residual connection 1: feed-forward sublayer ----
    h1 = ln_matmul(x2d, params["w_1"], params["b_1"],
                   params["alpha2"], params["beta2"], eps=eps,
                   relu=True, drop_scale=drops["ffn"])                # (rows, d_ff)
    x2d = matmul_dropout_residual(h1, params["w_2"], params["b_2"],
                                  x2d, drops["resid2"])
    return x2d.reshape(B, S, D)


# ----------------------------------------------------------------------------
# pure-JAX reference of the exact same math (for the correctness check)
# ----------------------------------------------------------------------------
def encoder_block_ref(x, src_mask, params, drops, *, h, eps=1e-6):
    B, S, D = x.shape
    d_k = D // h
    rows = B * S

    def ln(t, alpha, beta):
        mean = t.mean(-1, keepdims=True)
        diff = t - mean
        var = (diff * diff).sum(-1, keepdims=True) / (t.shape[-1] - 1)
        return alpha[0] * diff / (jnp.sqrt(var) + eps) + beta[0]

    n1 = ln(x, params["alpha1"], params["beta1"]).reshape(rows, D)
    qkv = n1 @ params["w_qkv"] + params["b_qkv"]
    qkv = qkv.reshape(B, S, 3, h, d_k)
    q = qkv[:, :, 0].transpose(0, 2, 1, 3)
    k = qkv[:, :, 1].transpose(0, 2, 1, 3)
    v = qkv[:, :, 2].transpose(0, 2, 1, 3)
    scores = jnp.einsum("bhqd,bhkd->bhqk", q, k) / math.sqrt(d_k)
    scores = jnp.where(src_mask == 0.0, -1000000000.0, scores)
    attn = jax.nn.softmax(scores, axis=-1) * drops["attn"]
    a2d = jnp.einsum("bhqk,bhkd->bhqd", attn, v).transpose(0, 2, 1, 3).reshape(rows, D)
    x1 = x.reshape(rows, D) + drops["resid1"] * (a2d @ params["w_o"] + params["b_o"])

    n2 = ln(x1.reshape(B, S, D), params["alpha2"], params["beta2"]).reshape(rows, D)
    h1 = jnp.maximum(n2 @ params["w_1"] + params["b_1"], 0.0) * drops["ffn"]
    x2 = x1 + drops["resid2"] * (h1 @ params["w_2"] + params["b_2"])
    return x2.reshape(B, S, D)


# ----------------------------------------------------------------------------
if __name__ == "__main__":
    B, S, D, H, D_FF = 2, 16, 128, 4, 256     # lane dims are multiples of 128
    P = 0.1                                   # dropout prob (training mode)

    key = jax.random.PRNGKey(0)
    ks = jax.random.split(key, 16)
    x = jax.random.normal(ks[0], (B, S, D), dtype=jnp.float32)

    def lin(kw, kb, fan_in, fan_out):
        w = jax.random.normal(kw, (fan_in, fan_out), jnp.float32) / math.sqrt(fan_in)
        b = jax.random.normal(kb, (fan_out,), jnp.float32) * 0.02
        return w, b

    w_q, b_q = lin(ks[1], ks[2], D, D)
    w_k, b_k = lin(ks[3], ks[4], D, D)
    w_v, b_v = lin(ks[5], ks[6], D, D)
    w_o, b_o = lin(ks[7], ks[8], D, D)
    w_1, b_1 = lin(ks[9], ks[10], D, D_FF)
    w_2, b_2 = lin(ks[11], ks[12], D_FF, D)

    params = {
        "w_qkv": jnp.concatenate([w_q, w_k, w_v], axis=1),   # (D, 3D)
        "b_qkv": jnp.concatenate([b_q, b_k, b_v], axis=0),   # (3D,)
        "w_o": w_o, "b_o": b_o,
        "w_1": w_1, "b_1": b_1,
        "w_2": w_2, "b_2": b_2,
        # LayerNormalizaion params (per __init__: ones(1), zeros(1))
        "alpha1": jnp.ones((1,), jnp.float32), "beta1": jnp.zeros((1,), jnp.float32),
        "alpha2": jnp.ones((1,), jnp.float32), "beta2": jnp.zeros((1,), jnp.float32),
    }

    # padding-style src_mask: batch 0 sees all keys, batch 1 only the first 12
    valid = jnp.array([S, 12])
    keep_cols = (jnp.arange(S)[None, :] < valid[:, None]).astype(jnp.float32)  # (B, S)
    src_mask = jnp.broadcast_to(keep_cols[:, None, None, :], (B, 1, S, S))

    # deterministic dropout masks (training-mode semantics), shared with the ref
    drops = make_dropout_scales(jax.random.PRNGKey(123), P, B, S, D, H, D_FF)

    out = encoder_block(x, src_mask, params, drops, h=H)
    jax.block_until_ready(out)
    assert out.shape == (B, S, D)

    ref = encoder_block_ref(x, src_mask, params, drops, h=H)
    assert jnp.allclose(out, ref, atol=2e-2, rtol=2e-2), "mismatch vs reference"

    # also exercise the no-dropout (eval) path
    drops0 = make_dropout_scales(jax.random.PRNGKey(1), 0.0, B, S, D, H, D_FF)
    out0 = encoder_block(x, src_mask, params, drops0, h=H)
    jax.block_until_ready(out0)
    ref0 = encoder_block_ref(x, src_mask, params, drops0, h=H)
    assert jnp.allclose(out0, ref0, atol=2e-2, rtol=2e-2), "mismatch vs reference (p=0)"

    print("KERNEL_OK")
</pallas_src>

<mosaic_0001>
module attributes {stable_mosaic.version = 11 : i64} {
  func.func @_ln_matmul_kernel(%arg0: i32, %arg1: memref<1xf32, #tpu.memory_space<smem>>, %arg2: memref<1xf32, #tpu.memory_space<smem>>, %arg3: memref<32x128xf32, #tpu.memory_space<vmem>>, %arg4: memref<128x384xf32, #tpu.memory_space<vmem>>, %arg5: memref<1x384xf32, #tpu.memory_space<vmem>>, %arg6: memref<32x384xf32, #tpu.memory_space<vmem>>) attributes {dimension_semantics = [#tpu.dimension_semantics<parallel>], iteration_bounds = array<i64: 1>, scalar_prefetch = 0 : i64, scratch_operands = 0 : i64, tpu.core_type = #tpu.core_type<tc>, window_params = [{transform_indices = @transform_0, window_bounds = array<i64: 1>}, {transform_indices = @transform_1, window_bounds = array<i64: 1>}, {transform_indices = @transform_2, window_bounds = array<i64: 32, 128>}, {pipeline_mode = #tpu.pipeline_mode<synchronous>, transform_indices = @transform_3, window_bounds = array<i64: 128, 384>}, {pipeline_mode = #tpu.pipeline_mode<synchronous>, transform_indices = @transform_4, window_bounds = array<i64: 1, 384>}, {transform_indices = @transform_5, window_bounds = array<i64: 32, 384>}]} {
    %c0 = arith.constant 0 : index
    %c0_0 = arith.constant 0 : index
    %0 = vector.load %arg3[%c0, %c0_0] : memref<32x128xf32, #tpu.memory_space<vmem>>, vector<32x128xf32>
    %cst = arith.constant dense<0.000000e+00> : vector<32xf32>
    %1 = vector.multi_reduction <add>, %0, %cst [1] : vector<32x128xf32> to vector<32xf32>
    %2 = vector.shape_cast %1 : vector<32xf32> to vector<32x1xf32>
    %3 = arith.mulf %0, %0 : vector<32x128xf32>
    %cst_1 = arith.constant dense<0.000000e+00> : vector<32xf32>
    %4 = vector.multi_reduction <add>, %3, %cst_1 [1] : vector<32x128xf32> to vector<32xf32>
    %5 = vector.shape_cast %4 : vector<32xf32> to vector<32x1xf32>
    %cst_2 = arith.constant 7.812500e-03 : f32
    %6 = vector.broadcast %cst_2 : f32 to vector<32x1xf32>
    %7 = arith.mulf %2, %6 : vector<32x1xf32>
    %8 = arith.mulf %2, %7 : vector<32x1xf32>
    %9 = arith.subf %5, %8 : vector<32x1xf32>
    %cst_3 = arith.constant 0.00787401571 : f32
    %10 = vector.broadcast %cst_3 : f32 to vector<32x1xf32>
    %11 = arith.mulf %9, %10 : vector<32x1xf32>
    %cst_4 = arith.constant 0.000000e+00 : f32
    %12 = vector.broadcast %cst_4 : f32 to vector<32x1xf32>
    %13 = arith.maximumf %11, %12 : vector<32x1xf32>
    %14 = math.sqrt %13 : vector<32x1xf32>
    %cst_5 = arith.constant 9.99999997E-7 : f32
    %15 = vector.broadcast %cst_5 : f32 to vector<32x1xf32>
    %16 = arith.addf %14, %15 : vector<32x1xf32>
    %cst_6 = arith.constant 1.000000e+00 : f32
    %17 = vector.broadcast %cst_6 : f32 to vector<32x1xf32>
    %18 = arith.divf %17, %16 : vector<32x1xf32>
    %c0_7 = arith.constant 0 : index
    %19 = memref.load %arg1[%c0_7] : memref<1xf32, #tpu.memory_space<smem>>
    %20 = vector.broadcast %19 : f32 to vector<32x1xf32>
    %21 = arith.mulf %20, %18 : vector<32x1xf32>
    %22 = vector.broadcast %7 : vector<32x1xf32> to vector<32x128xf32>
    %23 = arith.subf %0, %22 : vector<32x128xf32>
    %24 = vector.broadcast %21 : vector<32x1xf32> to vector<32x128xf32>
    %25 = arith.mulf %24, %23 : vector<32x128xf32>
    %c0_8 = arith.constant 0 : index
    %26 = memref.load %arg2[%c0_8] : memref<1xf32, #tpu.memory_space<smem>>
    %27 = vector.broadcast %26 : f32 to vector<32x128xf32>
    %28 = arith.addf %25, %27 : vector<32x128xf32>
    %c0_9 = arith.constant 0 : index
    %c0_10 = arith.constant 0 : index
    %29 = vector.load %arg4[%c0_9, %c0_10] : memref<128x384xf32, #tpu.memory_space<vmem>>, vector<128x384xf32>
    %cst_11 = arith.constant dense<0.000000e+00> : vector<32x384xf32>
    %30 = tpu.matmul %28, %29, %cst_11 {dimension_numbers = #tpu.dot_dimension_numbers<[1], [0], [0], [1], [0, 0, 1, 1], [], []>} : vector<32x128xf32>, vector<128x384xf32>, vector<32x384xf32> -> vector<32x384xf32>
    %c0_12 = arith.constant 0 : index
    %c0_13 = arith.constant 0 : index
    %31 = vector.load %arg5[%c0_12, %c0_13] : memref<1x384xf32, #tpu.memory_space<vmem>>, vector<1x384xf32>
    %32 = vector.broadcast %31 : vector<1x384xf32> to vector<32x384xf32>
    %33 = arith.addf %30, %32 : vector<32x384xf32>
    %c0_14 = arith.constant 0 : index
    %c0_15 = arith.constant 0 : index
    %34 = vector.load %arg6[%c0_14, %c0_15] : memref<32x384xf32, #tpu.memory_space<vmem>>, vector<32x384xf32>
    tpu.vector_store %arg6[%c0_14, %c0_15], %33 {strides = array<i32>} : memref<32x384xf32, #tpu.memory_space<vmem>>, vector<32x384xf32>,
    return
  }
  func.func @transform_0(%arg0: i32) -> i32 {
    %c0_i32 = arith.constant 0 : i32
    %c0_i32_0 = arith.constant 0 : i32
    return %c0_i32 : i32
  }
  func.func @transform_1(%arg0: i32) -> i32 {
    %c0_i32 = arith.constant 0 : i32
    %c0_i32_0 = arith.constant 0 : i32
    return %c0_i32 : i32
  }
  func.func @transform_2(%arg0: i32) -> (i32, i32) {
    %c0_i32 = arith.constant 0 : i32
    %c0_i32_0 = arith.constant 0 : i32
    return %arg0, %c0_i32 : i32, i32
  }
  func.func @transform_3(%arg0: i32) -> (i32, i32) {
    %c0_i32 = arith.constant 0 : i32
    %c0_i32_0 = arith.constant 0 : i32
    %c0_i32_1 = arith.constant 0 : i32
    return %c0_i32, %c0_i32_0 : i32, i32
  }
  func.func @transform_4(%arg0: i32) -> (i32, i32) {
    %c0_i32 = arith.constant 0 : i32
    %c0_i32_0 = arith.constant 0 : i32
    %c0_i32_1 = arith.constant 0 : i32
    return %c0_i32, %c0_i32_0 : i32, i32
  }
  func.func @transform_5(%arg0: i32) -> (i32, i32) {
    %c0_i32 = arith.constant 0 : i32
    %c0_i32_0 = arith.constant 0 : i32
    return %arg0, %c0_i32 : i32, i32
  }
}

</mosaic_0001>

<llo_original>
// kernel: tpu_custom_call.1
$region0: #{tpu_custom_call.1}
  #allocation0 [shape = 'u32[]', space=smem, size = 0x4, offset = 0x4, fixed_abs, tag = 'smem constant byte address 0x4 - core index']
  #allocation1 [shape = 'u32[144,128]{1,0:T(1,128)}', space=vmem, size = 0x12000, scoped, tag = 'internal scratch']
  #allocation2 [shape = 'f32[1]{0:T(128)S(6)}', space=smem, size = 0x200, scoped, tag = 'scoped memory for tpu_custom_call.1']
  #allocation3 [shape = 'f32[1]{0:T(128)S(6)}', space=smem, size = 0x200, scoped, tag = 'scoped memory for tpu_custom_call.1']
  %s0 = inlined_call_operand.<no memory space> [shape: f32[1], index: 0, kind: input, shape index: {}]
  %s1 = inlined_call_operand.<no memory space> [shape: f32[1], index: 1, kind: input, shape index: {}]
  %s2 = inlined_call_operand.hbm [shape: f32[32,128], index: 2, kind: input, shape index: {}]
  %s3 = inlined_call_operand.hbm [shape: f32[128,384], index: 3, kind: input, shape index: {}]
  %s4 = inlined_call_operand.vmem [shape: f32[1,384], index: 4, kind: input, shape index: {}]
  %s5 = inlined_call_operand.hbm [shape: f32[32,384], index: 5, kind: output, shape index: {}]
  %s6 = sld [smem:[#allocation0]]
  $region38: #{tpu_custom_call.1} parent=0
    _
  %s8 = ssub.s32 1, %s6
  %s9 = scalar_select 0, %s8, %s6
  %10 = sst [smem:[#allocation2]] %s0
  %11 = sst [smem:[#allocation3]] %s1
  $region1: #{tpu_custom_call.1} parent=0
    #allocation4 [shape = 'u8[16384]{0}', space=vmem, size = 0x4000, scoped, tag = 'input window, operand 2, single buffered']
    #allocation5 [shape = 's32[1]{0}', space=sflag, size = 0x4, scoped, tag = 'scoped memory for tpu_custom_call.1']
    #allocation6 [shape = 's32[1]{0}', space=sflag, size = 0x4, scoped, tag = 'scoped memory for tpu_custom_call.1']
    #allocation7 [shape = 'u8[196608]{0}', space=vmem, size = 0x30000, scoped, tag = 'input window, operand 3, single buffered']
    #allocation8 [shape = 's32[1]{0}', space=sflag, size = 0x4, scoped, tag = 'scoped memory for tpu_custom_call.1']
    #allocation9 [shape = 'u8[49152]{0}', space=vmem, size = 0xc000, scoped, tag = 'output window, operand 0, single buffered']
    %12 = vsyncpa [#allocation5], 0
    %13 = vsyncpa [#allocation8], 0
    %14 = vsyncpa [#allocation6], 0
    // Predicated region
    $region2: #{tpu_custom_call.1} parent=1 // pred_check
      _
    $region3: #{tpu_custom_call.1} parent=1 // pred_check_branch
      %16 = sbr.rel (0) target = $region5
    $region4: #{tpu_custom_call.1} parent=1 // pred_region
      _
    $region5: #{tpu_custom_call.1} parent=1 // pred_fallthru
      _
    // Predicated region
    $region6: #{tpu_custom_call.1} parent=1 // pred_check
      _
    $region7: #{tpu_custom_call.1} parent=1 // pred_check_branch
      %18 = sbr.rel (0) target = $region9
    $region8: #{tpu_custom_call.1} parent=1 // pred_region
      _
    $region9: #{tpu_custom_call.1} parent=1 // pred_fallthru
      _
    // Predicated region
    $region10: #{tpu_custom_call.1} parent=1 // pred_check
      _
    $region11: #{tpu_custom_call.1} parent=1 // pred_check_branch
      %20 = sbr.rel (0) target = $region13
    $region12: #{tpu_custom_call.1} parent=1 // pred_region
      %s22 = ssub.s32 512, 512
      %23 = vsyncadd [#allocation5], %s22
      %s24 = sshll.u32 [#allocation4], 4
      %s25 = int_to_ptr.vmem [resolvable:$true] %s24
      %30 = dma.hbm_to_vmem [thread:$0]  %s2, 512, %s25, [#allocation5], 128, 128, 8
    $region13: #{tpu_custom_call.1} parent=1 // pred_fallthru
      _
    // Predicated region
    $region14: #{tpu_custom_call.1} parent=1 // pred_check
      _
    $region15: #{tpu_custom_call.1} parent=1 // pred_check_branch
      %32 = sbr.rel (0) target = $region17
    $region16: #{tpu_custom_call.1} parent=1 // pred_region
      %s34 = ssub.s32 6144, 6144
      %35 = vsyncadd [#allocation8], %s34
      %s36 = sshll.u32 [#allocation7], 4
      %s37 = int_to_ptr.vmem [resolvable:$true] %s36
      %42 = dma.hbm_to_vmem [thread:$0]  %s3, 6144, %s37, [#allocation8], 384, 384, 24
    $region17: #{tpu_custom_call.1} parent=1 // pred_fallthru
      _
    // Predicated region
    $region18: #{tpu_custom_call.1} parent=1 // pred_check
      _
    $region19: #{tpu_custom_call.1} parent=1 // pred_check_branch
      %44 = sbr.rel (0) target = $region21
    $region20: #{tpu_custom_call.1} parent=1 // pred_region
      _
    $region21: #{tpu_custom_call.1} parent=1 // pred_fallthru
      _
    // Predicated region
    $region22: #{tpu_custom_call.1} parent=1 // pred_check
      _
    $region23: #{tpu_custom_call.1} parent=1 // pred_check_branch
      %46 = sbr.rel (0) target = $region25
    $region24: #{tpu_custom_call.1} parent=1 // pred_region
      %47 = dma.done [#allocation5], 512
    $region25: #{tpu_custom_call.1} parent=1 // pred_fallthru
      _
    // Predicated region
    $region26: #{tpu_custom_call.1} parent=1 // pred_check
      _
    $region27: #{tpu_custom_call.1} parent=1 // pred_check_branch
      %49 = sbr.rel (0) target = $region29
    $region28: #{tpu_custom_call.1} parent=1 // pred_region
      %50 = dma.done [#allocation8], 6144
    $region29: #{tpu_custom_call.1} parent=1 // pred_fallthru
      _
    %v51 = vld [vmem:[#allocation4] sm:$0xff]
    %v52 = vld [vmem:[#allocation4 + $0x8] sm:$0xff]
    %v53 = vld [vmem:[#allocation4 + $0x10] sm:$0xff]
    %v54 = vld [vmem:[#allocation4 + $0x18] sm:$0xff]
    %55 = vadd.xlane.f32.xlu0 %v51
    %v56 = vpop.xlane.xlu0 %55
    %57 = vadd.xlane.f32.xlu0 %v52
    %v58 = vpop.xlane.xlu0 %57
    %59 = vadd.xlane.f32.xlu0 %v53
    %v60 = vpop.xlane.xlu0 %59
    %61 = vadd.xlane.f32.xlu0 %v54
    %v62 = vpop.xlane.xlu0 %61
    %v63 = vmul.f32 %v51, %v51
    %v64 = vmul.f32 %v52, %v52
    %v65 = vmul.f32 %v53, %v53
    %v66 = vmul.f32 %v54, %v54
    %67 = vadd.xlane.f32.xlu0 %v63
    %v68 = vpop.xlane.xlu0 %67
    %69 = vadd.xlane.f32.xlu0 %v64
    %v70 = vpop.xlane.xlu0 %69
    %71 = vadd.xlane.f32.xlu0 %v65
    %v72 = vpop.xlane.xlu0 %71
    %73 = vadd.xlane.f32.xlu0 %v66
    %v74 = vpop.xlane.xlu0 %73
    %v75 = vmul.f32 %v56, 0.0078125
    %v76 = vmul.f32 %v58, 0.0078125
    %v77 = vmul.f32 %v60, 0.0078125
    %v78 = vmul.f32 %v62, 0.0078125
    %v79 = vmul.f32 %v56, %v75
    %v80 = vmul.f32 %v58, %v76
    %v81 = vmul.f32 %v60, %v77
    %v82 = vmul.f32 %v62, %v78
    %v83 = vsub.f32 %v68, %v79
    %v84 = vsub.f32 %v70, %v80
    %v85 = vsub.f32 %v72, %v81
    %v86 = vsub.f32 %v74, %v82
    %v87 = vmul.f32 %v83, 0.007874016
    %v88 = vmul.f32 %v84, 0.007874016
    %v89 = vmul.f32 %v85, 0.007874016
    %v90 = vmul.f32 %v86, 0.007874016
    %v91 = vmax.f32 %v87, 0.0
    %v92 = vmax.f32 %v88, 0.0
    %v93 = vmax.f32 %v89, 0.0
    %v94 = vmax.f32 %v90, 0.0
    %v95 = vrsqrt.pop %v91
    %v96 = vmul.f32 %v91, %v95
    %vm97 = vcmp.eq.f32.partialorder %v91, inf
    %v98 = vsel %vm97, %v91, %v96
    %vm99 = vcmp.eq.f32.partialorder %v91, 0.0
    %v100 = vand.u32 %v91, 2147483648
    %v101 = vsel %vm99, %v100, %v98
    %v102 = vrsqrt.pop %v92
    %v103 = vmul.f32 %v92, %v102
    %vm104 = vcmp.eq.f32.partialorder %v92, inf
    %v105 = vsel %vm104, %v92, %v103
    %vm106 = vcmp.eq.f32.partialorder %v92, 0.0
    %v107 = vand.u32 %v92, 2147483648
    %v108 = vsel %vm106, %v107, %v105
    %v109 = vrsqrt.pop %v93
    %v110 = vmul.f32 %v93, %v109
    %vm111 = vcmp.eq.f32.partialorder %v93, inf
    %v112 = vsel %vm111, %v93, %v110
    %vm113 = vcmp.eq.f32.partialorder %v93, 0.0
    %v114 = vand.u32 %v93, 2147483648
    %v115 = vsel %vm113, %v114, %v112
    %v116 = vrsqrt.pop %v94
    %v117 = vmul.f32 %v94, %v116
    %vm118 = vcmp.eq.f32.partialorder %v94, inf
    %v119 = vsel %vm118, %v94, %v117
    %vm120 = vcmp.eq.f32.partialorder %v94, 0.0
    %v121 = vand.u32 %v94, 2147483648
    %v122 = vsel %vm120, %v121, %v119
    %v123 = vadd.f32 %v101, 1e-06
    %v124 = vadd.f32 %v108, 1e-06
    %v125 = vadd.f32 %v115, 1e-06
    %v126 = vadd.f32 %v122, 1e-06
    %v127 = vrcp.pop %v123
    %v128 = vmul.f32 1.0, %v127
    %v129 = vrcp.pop %v124
    %v130 = vmul.f32 1.0, %v129
    %v131 = vrcp.pop %v125
    %v132 = vmul.f32 1.0, %v131
    %v133 = vrcp.pop %v126
    %v134 = vmul.f32 1.0, %v133
    %s135 = sld [smem:[#allocation2]]
    %v136 = vstv %s135
    %v137 = vmul.f32 %v136, %v128
    %v138 = vmul.f32 %v136, %v130
    %v139 = vmul.f32 %v136, %v132
    %v140 = vmul.f32 %v136, %v134
    %v141 = vsub.f32 %v51, %v75
    %v142 = vsub.f32 %v52, %v76
    %v143 = vsub.f32 %v53, %v77
    %v144 = vsub.f32 %v54, %v78
    %v145 = vmul.f32 %v137, %v141
    %v146 = vmul.f32 %v138, %v142
    %v147 = vmul.f32 %v139, %v143
    %v148 = vmul.f32 %v140, %v144
    %s149 = sld [smem:[#allocation3]]
    %v150 = vstv %s149
    %v151 = vadd.f32 %v145, %v150
    %v152 = vadd.f32 %v146, %v150
    %v153 = vadd.f32 %v147, %v150
    %v154 = vadd.f32 %v148, %v150
    %v155 = vld [vmem:[#allocation7] sm:$0xff]
    %v156 = vld [vmem:[#allocation7 + $0x8] sm:$0xff]
    %v157 = vld [vmem:[#allocation7 + $0x10] sm:$0xff]
    %v158 = vld [vmem:[#allocation7 + $0x18] sm:$0xff]
    %v159 = vld [vmem:[#allocation7 + $0x20] sm:$0xff]
    %v160 = vld [vmem:[#allocation7 + $0x28] sm:$0xff]
    %v161 = vld [vmem:[#allocation7 + $0x30] sm:$0xff]
    %v162 = vld [vmem:[#allocation7 + $0x38] sm:$0xff]
    %v163 = vld [vmem:[#allocation7 + $0x40] sm:$0xff]
    %v164 = vld [vmem:[#allocation7 + $0x48] sm:$0xff]
    %v165 = vld [vmem:[#allocation7 + $0x50] sm:$0xff]
    %v166 = vld [vmem:[#allocation7 + $0x58] sm:$0xff]
    %v167 = vld [vmem:[#allocation7 + $0x60] sm:$0xff]
    %v168 = vld [vmem:[#allocation7 + $0x68] sm:$0xff]
    %v169 = vld [vmem:[#allocation7 + $0x70] sm:$0xff]
    %v170 = vld [vmem:[#allocation7 + $0x78] sm:$0xff]
    %v171 = vld [vmem:[#allocation7 + $0x80] sm:$0xff]
    %v172 = vld [vmem:[#allocation7 + $0x88] sm:$0xff]
    %v173 = vld [vmem:[#allocation7 + $0x90] sm:$0xff]
    %v174 = vld [vmem:[#allocation7 + $0x98] sm:$0xff]
    %v175 = vld [vmem:[#allocation7 + $0xa0] sm:$0xff]
    %v176 = vld [vmem:[#allocation7 + $0xa8] sm:$0xff]
    %v177 = vld [vmem:[#allocation7 + $0xb0] sm:$0xff]
    %v178 = vld [vmem:[#allocation7 + $0xb8] sm:$0xff]
    %v179 = vld [vmem:[#allocation7 + $0xc0] sm:$0xff]
    %v180 = vld [vmem:[#allocation7 + $0xc8] sm:$0xff]
    %v181 = vld [vmem:[#allocation7 + $0xd0] sm:$0xff]
    %v182 = vld [vmem:[#allocation7 + $0xd8] sm:$0xff]
    %v183 = vld [vmem:[#allocation7 + $0xe0] sm:$0xff]
    %v184 = vld [vmem:[#allocation7 + $0xe8] sm:$0xff]
    %v185 = vld [vmem:[#allocation7 + $0xf0] sm:$0xff]
    %v186 = vld [vmem:[#allocation7 + $0xf8] sm:$0xff]
    %v187 = vld [vmem:[#allocation7 + $0x100] sm:$0xff]
    %v188 = vld [vmem:[#allocation7 + $0x108] sm:$0xff]
    %v189 = vld [vmem:[#allocation7 + $0x110] sm:$0xff]
    %v190 = vld [vmem:[#allocation7 + $0x118] sm:$0xff]
    %v191 = vld [vmem:[#allocation7 + $0x120] sm:$0xff]
    %v192 = vld [vmem:[#allocation7 + $0x128] sm:$0xff]
    %v193 = vld [vmem:[#allocation7 + $0x130] sm:$0xff]
    %v194 = vld [vmem:[#allocation7 + $0x138] sm:$0xff]
    %v195 = vld [vmem:[#allocation7 + $0x140] sm:$0xff]
    %v196 = vld [vmem:[#allocation7 + $0x148] sm:$0xff]
    %v197 = vld [vmem:[#allocation7 + $0x150] sm:$0xff]
    %v198 = vld [vmem:[#allocation7 + $0x158] sm:$0xff]
    %v199 = vld [vmem:[#allocation7 + $0x160] sm:$0xff]
    %v200 = vld [vmem:[#allocation7 + $0x168] sm:$0xff]
    %v201 = vld [vmem:[#allocation7 + $0x170] sm:$0xff]
    %v202 = vld [vmem:[#allocation7 + $0x178] sm:$0xff]
    %v203 = vld [vmem:[%s4] sm:$0x7]
    %v205 = vlaneseq
    %v206 = vshrl.u32 %v205, 7
    %v207 = vsub.s32 0, %v206
    %v208 = vrot.slane %v203, %v207
    %v209 = vlaneseq
    %v210 = vshrl.u32 %v209, 7
    %v211 = vsub.s32 1, %v210
    %v212 = vrot.slane %v203, %v211
    %v213 = vlaneseq
    %v214 = vshrl.u32 %v213, 7
    %v215 = vsub.s32 2, %v214
    %v216 = vrot.slane %v203, %v215
    %220 = vmatprep.subr.mxu0 %v156
    %221 = vmatpush1.msra.mxu0 %v155
    %222 = vmatprep.subr.mxu0 %v159
    %223 = vmatpush1.msra.mxu0 %v158
    %224 = vmatprep.subr.mxu0 %v162
    %225 = vmatpush1.msra.mxu0 %v161
    %226 = vmatprep.subr.mxu0 %v165
    %227 = vmatpush1.msra.mxu0 %v164
    %228 = vmatprep.subr.mxu0 %v168
    %229 = vmatpush1.msra.mxu0 %v167
    %230 = vmatprep.subr.mxu0 %v171
    %231 = vmatpush1.msra.mxu0 %v170
    %232 = vmatprep.subr.mxu0 %v174
    %233 = vmatpush1.msra.mxu0 %v173
    %234 = vmatprep.subr.mxu0 %v177
    %235 = vmatpush1.msra.mxu0 %v176
    %236 = vmatprep.subr.mxu0 %v180
    %237 = vmatpush1.msra.mxu0 %v179
    %238 = vmatprep.subr.mxu0 %v183
    %239 = vmatpush1.msra.mxu0 %v182
    %240 = vmatprep.subr.mxu0 %v186
    %241 = vmatpush1.msra.mxu0 %v185
    %242 = vmatprep.subr.mxu0 %v189
    %243 = vmatpush1.msra.mxu0 %v188
    %244 = vmatprep.subr.mxu0 %v192
    %245 = vmatpush1.msra.mxu0 %v191
    %246 = vmatprep.subr.mxu0 %v195
    %247 = vmatpush1.msra.mxu0 %v194
    %248 = vmatprep.subr.mxu0 %v198
    %249 = vmatpush1.msra.mxu0 %v197
    %250 = vmatprep.subr.mxu0 %v201
    %251 = vmatpush1.msra.mxu0 %v200
    %252 = vmatprep.subr.mxu0 0.0
    %253 = vmatpush1.msra.mxu0 0.0
    %254 = vmatprep.subr.mxu0 0.0
    %255 = vmatpush1.msra.mxu0 0.0
    %256 = vmatprep.subr.mxu0 0.0
    %257 = vmatpush1.msra.mxu0 0.0
    %258 = vmatprep.subr.mxu0 0.0
    %259 = vmatpush1.msra.mxu0 0.0
    %260 = vmatprep.subr.mxu0 0.0
    %261 = vmatpush1.msra.mxu0 0.0
    %262 = vmatprep.subr.mxu0 0.0
    %263 = vmatpush1.msra.mxu0 0.0
    %264 = vmatprep.subr.mxu0 0.0
    %265 = vmatpush1.msra.mxu0 0.0
    %266 = vmatprep.subr.mxu0 0.0
    %267 = vmatpush1.msra.mxu0 0.0
    %268 = vmatprep.subr.mxu0 0.0
    %269 = vmatpush1.msra.mxu0 0.0
    %270 = vmatprep.subr.mxu0 0.0
    %271 = vmatpush1.msra.mxu0 0.0
    %272 = vmatprep.subr.mxu0 0.0
    %273 = vmatpush1.msra.mxu0 0.0
    %274 = vmatprep.subr.mxu0 0.0
    %275 = vmatpush1.msra.mxu0 0.0
    %276 = vmatprep.subr.mxu0 0.0
    %277 = vmatpush1.msra.mxu0 0.0
    %278 = vmatprep.subr.mxu0 0.0
    %279 = vmatpush1.msra.mxu0 0.0
    %280 = vmatprep.subr.mxu0 0.0
    %281 = vmatpush1.msra.mxu0 0.0
    %282 = vmatprep.subr.mxu0 0.0
    %283 = vmatpush1.msra.mxu0 0.0
    %284 = vmatprep.mubr.f32.mxu0 0.0
    %285 = vmatmul.mubr.f32.gmra.mrb[0].mxu0 %v151
    %v286 = vpop.f32.mrb[0].mxu0
    %v287 = vadd.f32 %v208, %v286
    %v288 = vpop.f32.mrb[0].mxu0
    %v289 = vadd.f32 %v212, %v288
    %290 = vmatprep.mubr.f32.mxu0 0.0
    %291 = vmatmul.mubr.f32.gmra.mrb[0].mxu0 %v152
    %v292 = vpop.f32.mrb[0].mxu0
    %v293 = vadd.f32 %v208, %v292
    %v294 = vpop.f32.mrb[0].mxu0
    %v295 = vadd.f32 %v212, %v294
    %296 = vmatprep.mubr.f32.mxu0 0.0
    %297 = vmatmul.mubr.f32.gmra.mrb[0].mxu0 %v153
    %v298 = vpop.f32.mrb[0].mxu0
    %v299 = vadd.f32 %v208, %v298
    %v300 = vpop.f32.mrb[0].mxu0
    %v301 = vadd.f32 %v212, %v300
    %302 = vmatprep.mubr.f32.mxu0 0.0
    %303 = vmatmul.mubr.f32.gmra.mrb[0].mxu0 %v154
    %v304 = vpop.f32.mrb[0].mxu0
    %v305 = vadd.f32 %v208, %v304
    %v306 = vpop.f32.mrb[0].mxu0
    %v307 = vadd.f32 %v212, %v306
    %308 = vdwg.mxu0
    %309 = vmatprep.subr.mxu0 0.0
    %310 = vmatpush1.msra.mxu0 %v157
    %311 = vmatprep.subr.mxu0 0.0
    %312 = vmatpush1.msra.mxu0 %v160
    %313 = vmatprep.subr.mxu0 0.0
    %314 = vmatpush1.msra.mxu0 %v163
    %315 = vmatprep.subr.mxu0 0.0
    %316 = vmatpush1.msra.mxu0 %v166
    %317 = vmatprep.subr.mxu0 0.0
    %318 = vmatpush1.msra.mxu0 %v169
    %319 = vmatprep.subr.mxu0 0.0
    %320 = vmatpush1.msra.mxu0 %v172
    %321 = vmatprep.subr.mxu0 0.0
    %322 = vmatpush1.msra.mxu0 %v175
    %323 = vmatprep.subr.mxu0 0.0
    %324 = vmatpush1.msra.mxu0 %v178
    %325 = vmatprep.subr.mxu0 0.0
    %326 = vmatpush1.msra.mxu0 %v181
    %327 = vmatprep.subr.mxu0 0.0
    %328 = vmatpush1.msra.mxu0 %v184
    %329 = vmatprep.subr.mxu0 0.0
    %330 = vmatpush1.msra.mxu0 %v187
    %331 = vmatprep.subr.mxu0 0.0
    %332 = vmatpush1.msra.mxu0 %v190
    %333 = vmatprep.subr.mxu0 0.0
    %334 = vmatpush1.msra.mxu0 %v193
    %335 = vmatprep.subr.mxu0 0.0
    %336 = vmatpush1.msra.mxu0 %v196
    %337 = vmatprep.subr.mxu0 0.0
    %338 = vmatpush1.msra.mxu0 %v199
    %339 = vmatprep.subr.mxu0 0.0
    %340 = vmatpush1.msra.mxu0 %v202
    %341 = vmatprep.subr.mxu0 0.0
    %342 = vmatpush1.msra.mxu0 0.0
    %343 = vmatprep.subr.mxu0 0.0
    %344 = vmatpush1.msra.mxu0 0.0
    %345 = vmatprep.subr.mxu0 0.0
    %346 = vmatpush1.msra.mxu0 0.0
    %347 = vmatprep.subr.mxu0 0.0
    %348 = vmatpush1.msra.mxu0 0.0
    %349 = vmatprep.subr.mxu0 0.0
    %350 = vmatpush1.msra.mxu0 0.0
    %351 = vmatprep.subr.mxu0 0.0
    %352 = vmatpush1.msra.mxu0 0.0
    %353 = vmatprep.subr.mxu0 0.0
    %354 = vmatpush1.msra.mxu0 0.0
    %355 = vmatprep.subr.mxu0 0.0
    %356 = vmatpush1.msra.mxu0 0.0
    %357 = vmatprep.subr.mxu0 0.0
    %358 = vmatpush1.msra.mxu0 0.0
    %359 = vmatprep.subr.mxu0 0.0
    %360 = vmatpush1.msra.mxu0 0.0
    %361 = vmatprep.subr.mxu0 0.0
    %362 = vmatpush1.msra.mxu0 0.0
    %363 = vmatprep.subr.mxu0 0.0
    %364 = vmatpush1.msra.mxu0 0.0
    %365 = vmatprep.subr.mxu0 0.0
    %366 = vmatpush1.msra.mxu0 0.0
    %367 = vmatprep.subr.mxu0 0.0
    %368 = vmatpush1.msra.mxu0 0.0
    %369 = vmatprep.subr.mxu0 0.0
    %370 = vmatpush1.msra.mxu0 0.0
    %371 = vmatprep.subr.mxu0 0.0
    %372 = vmatpush1.msra.mxu0 0.0
    %373 = vmatprep.mubr.f32.mxu0 0.0
    %374 = vmatmul.mubr.f32.gmra.mrb[0].mxu0 %v151
    %v375 = vpop.f32.mrb[0].mxu0
    %v376 = vadd.f32 %v216, %v375
    %v377 = vpop.f32.mrb[0].mxu0
    %378 = vmatprep.mubr.f32.mxu0 0.0
    %379 = vmatmul.mubr.f32.gmra.mrb[0].mxu0 %v152
    %v380 = vpop.f32.mrb[0].mxu0
    %v381 = vadd.f32 %v216, %v380
    %v382 = vpop.f32.mrb[0].mxu0
    %383 = vmatprep.mubr.f32.mxu0 0.0
    %384 = vmatmul.mubr.f32.gmra.mrb[0].mxu0 %v153
    %v385 = vpop.f32.mrb[0].mxu0
    %v386 = vadd.f32 %v216, %v385
    %v387 = vpop.f32.mrb[0].mxu0
    %388 = vmatprep.mubr.f32.mxu0 0.0
    %389 = vmatmul.mubr.f32.gmra.mrb[0].mxu0 %v154
    %v390 = vpop.f32.mrb[0].mxu0
    %v391 = vadd.f32 %v216, %v390
    %v392 = vpop.f32.mrb[0].mxu0
    %393 = vdwg.mxu0
    %394 = vst [vmem:[#allocation9] sm:$0xff] %v287
    %395 = vst [vmem:[#allocation9 + $0x8] sm:$0xff] %v289
    %396 = vst [vmem:[#allocation9 + $0x10] sm:$0xff] %v376
    %397 = vst [vmem:[#allocation9 + $0x18] sm:$0xff] %v293
    %398 = vst [vmem:[#allocation9 + $0x20] sm:$0xff] %v295
    %399 = vst [vmem:[#allocation9 + $0x28] sm:$0xff] %v381
    %400 = vst [vmem:[#allocation9 + $0x30] sm:$0xff] %v299
    %401 = vst [vmem:[#allocation9 + $0x38] sm:$0xff] %v301
    %402 = vst [vmem:[#allocation9 + $0x40] sm:$0xff] %v386
    %403 = vst [vmem:[#allocation9 + $0x48] sm:$0xff] %v305
    %404 = vst [vmem:[#allocation9 + $0x50] sm:$0xff] %v307
    %405 = vst [vmem:[#allocation9 + $0x58] sm:$0xff] %v391
    // Predicated region
    $region30: #{tpu_custom_call.1} parent=1 // pred_check
      _
    $region31: #{tpu_custom_call.1} parent=1 // pred_check_branch
      %407 = sbr.rel (0) target = $region33
    $region32: #{tpu_custom_call.1} parent=1 // pred_region
      %s409 = ssub.s32 1536, 1536
      %410 = vsyncadd [#allocation6], %s409
      %s411 = sshll.u32 [#allocation9], 4
      %s412 = int_to_ptr.vmem [resolvable:$true] %s411
      %417 = dma.vmem_to_hbm [thread:$0]  %s412, 1536, %s5, [#allocation6], 384, 384, 24
    $region33: #{tpu_custom_call.1} parent=1 // pred_fallthru
      _
    // Predicated region
    $region34: #{tpu_custom_call.1} parent=1 // pred_check
      _
    $region35: #{tpu_custom_call.1} parent=1 // pred_check_branch
      %419 = sbr.rel (0) target = $region37
    $region36: #{tpu_custom_call.1} parent=1 // pred_region
      %420 = dma.done [#allocation6], 1536
    $region37: #{tpu_custom_call.1} parent=1 // pred_fallthru
      _
    %421 = vsyncpa [#allocation5], 1
    %422 = vsyncpa [#allocation8], 1
    %423 = vsyncpa [#allocation6], 1

</llo_original>
